<compile_context>
chip_gen: v6e
topology: v6e:2x2x1
jax: 0.10.0
libtpu: 0.0.40
codegen_flags: <defaults>
</compile_context>

<pallas_src>
import functools

import jax
import jax.numpy as jnp
from jax.experimental import pallas as pl
from jax.experimental.pallas import tpu as pltpu

CTX_DIM = 512          # ctx_dim in the PyTorch module
SEQ_LEN = 77           # CLIP context length
N_CLS_CTX = 4          # learnable class-context tokens
RGB_N_CTX = 5          # -> rgb/ir prefix length = n_ctx + 1 = 6
IR_N_CTX = 5
COMMON_N_CTX = 4       # -> common prefix length = 5


# ---------------------------------------------------------------------------
# Pallas kernel
# ---------------------------------------------------------------------------
def _assemble_kernel(label_ref, template_ref, cls_hbm, out_ref,
                     cls_buf, sems, *, n_prefix, tb, num_rows):
    """Assemble prompts for one tile of `tb` batch rows.

    label_ref    : (b,) int32, SMEM (scalar prefetch)
    template_ref : (1, 77, 512) VMEM  -- prefix || zeros(4) || suffix for the mode
    cls_hbm      : (num_class, 4, 512) raw HBM ref (memory_space=pl.ANY)
    out_ref      : (tb, 77, 512) VMEM output block
    cls_buf      : (tb, 4, 512) VMEM scratch (gather landing buffer)
    sems         : (tb,) DMA semaphores
    """
    i = pl.program_id(0)

    # Kick off the per-row gathers cls_ctx[label[row]] -> cls_buf[r].
    # Tail rows of a ragged last block are clamped to a valid row; their output
    # is discarded by the clipped writeback anyway.
    copies = []
    for r in range(tb):
        row = jnp.minimum(i * tb + r, num_rows - 1)
        cp = pltpu.make_async_copy(cls_hbm.at[label_ref[row]],
                                   cls_buf.at[r], sems.at[r])
        cp.start()
        copies.append(cp)

    # While the gathers are in flight, lay down the mode template for all rows
    # with one aligned full-tile store.
    out_ref[...] = jnp.broadcast_to(template_ref[...], out_ref.shape)

    # Land the gathers and overwrite the 4-row class slot.
    for cp in copies:
        cp.wait()
    out_ref[:, n_prefix:n_prefix + N_CLS_CTX, :] = cls_buf[...]


# ---------------------------------------------------------------------------
# Wrapper around pallas_call
# ---------------------------------------------------------------------------
def assemble_prompts(label, cls_ctx, template, n_prefix, *, batch_tile=32):
    """prompts[i] = concat([prefix, cls_ctx[label[i]], suffix], axis=0) -> [b, 77, 512]."""
    b = int(label.shape[0])

    # >= 2 grid steps whenever b >= 2 so the "parallel" batch axis can shard
    # across both TensorCores on v7x; harmless extra step on single-TC v5e/v6e.
    tb = 1 if b < 2 else max(1, min(batch_tile, -(-b // 2)))
    steps = pl.cdiv(b, tb)

    # VMEM footprint (double-buffered output + template + gather buffer).
    elt = jnp.dtype(cls_ctx.dtype).itemsize
    need = (2 * tb * SEQ_LEN * CTX_DIM * elt        # output block x2
            + 2 * SEQ_LEN * CTX_DIM * elt           # template block x2
            + tb * N_CLS_CTX * CTX_DIM * elt        # gather scratch
            + (1 << 20))                            # headroom
    vmem_limit = need if need > (12 << 20) else None   # only override when the
                                                        # v5e 16 MiB default is tight

    kernel = functools.partial(_assemble_kernel,
                               n_prefix=n_prefix, tb=tb, num_rows=b)

    return pl.pallas_call(
        kernel,
        out_shape=jax.ShapeDtypeStruct((b, SEQ_LEN, CTX_DIM), cls_ctx.dtype),
        grid_spec=pltpu.PrefetchScalarGridSpec(
            num_scalar_prefetch=1,
            grid=(steps,),
            in_specs=[
                # mode template: same block every step -> stays resident in VMEM
                pl.BlockSpec((1, SEQ_LEN, CTX_DIM), lambda i, lbl: (0, 0, 0)),
                # full cls_ctx table stays in HBM; gathered manually per row
                pl.BlockSpec(memory_space=pl.ANY),
            ],
            out_specs=pl.BlockSpec((tb, SEQ_LEN, CTX_DIM),
                                   lambda i, lbl: (i, 0, 0)),
            scratch_shapes=[
                pltpu.VMEM((tb, N_CLS_CTX, CTX_DIM), cls_ctx.dtype),
                pltpu.SemaphoreType.DMA((tb,)),
            ]),
        compiler_params=pltpu.CompilerParams(
            dimension_semantics=("parallel",),
            vmem_limit_bytes=vmem_limit),
    )(label.astype(jnp.int32), template, cls_ctx)


# ---------------------------------------------------------------------------
# JAX-side "module": deterministic parameter/buffer construction + forward()
# ---------------------------------------------------------------------------
class PromptLearnerShare:
    def __init__(self, num_class, dtype=jnp.float32, key=jax.random.PRNGKey(0),
                 batch_tile=32):
        k_cls, k_rgb, k_ir, k_common = jax.random.split(key, 4)

        # TODO(synk): a real CLIP token_embedding(clip.tokenize(...)) lookup would
        # go here; we use deterministic random embeddings of identical shape.
        rgb_embedding = jax.random.normal(k_rgb, (1, SEQ_LEN, CTX_DIM), dtype)
        ir_embedding = jax.random.normal(k_ir, (1, SEQ_LEN, CTX_DIM), dtype)
        embedding = jax.random.normal(k_common, (1, SEQ_LEN, CTX_DIM), dtype)

        # nn.init.normal_(std=0.02)
        self.cls_ctx = 0.02 * jax.random.normal(
            k_cls, (num_class, N_CLS_CTX, CTX_DIM), dtype)

        # register_buffer slices (same index arithmetic as the PyTorch module)
        self.rgb_token_prefix = rgb_embedding[:, :RGB_N_CTX + 1, :]                  # [1, 6, 512]
        self.ir_token_prefix = ir_embedding[:, :IR_N_CTX + 1, :]                     # [1, 6, 512]
        self.token_prefix = embedding[:, :COMMON_N_CTX + 1, :]                       # [1, 5, 512]
        self.rgb_token_suffix = rgb_embedding[:, RGB_N_CTX + 1 + N_CLS_CTX:, :]      # [1, 67, 512]
        self.ir_token_suffix = ir_embedding[:, IR_N_CTX + 1 + N_CLS_CTX:, :]         # [1, 67, 512]
        self.token_suffix = embedding[:, COMMON_N_CTX + 1 + N_CLS_CTX:, :]           # [1, 68, 512]

        # Precomputed per-mode templates: prefix || zeros(4) || suffix -> [1, 77, 512]
        zeros_ctx = jnp.zeros((1, N_CLS_CTX, CTX_DIM), dtype)
        self._templates = {
            'rgb': (jnp.concatenate(
                [self.rgb_token_prefix, zeros_ctx, self.rgb_token_suffix], axis=1),
                RGB_N_CTX + 1),
            'ir': (jnp.concatenate(
                [self.ir_token_prefix, zeros_ctx, self.ir_token_suffix], axis=1),
                IR_N_CTX + 1),
            'common': (jnp.concatenate(
                [self.token_prefix, zeros_ctx, self.token_suffix], axis=1),
                COMMON_N_CTX + 1),
        }

        self.num_class = num_class
        self.n_cls_ctx = N_CLS_CTX
        self.batch_tile = batch_tile

    def forward(self, label, mode=None):
        if mode == 'get_cls_ctx':
            # ~8 KiB/row gather; a Pallas launch here would be pure overhead.
            return jnp.take(self.cls_ctx, label, axis=0)
        if mode not in self._templates:
            raise ValueError(f"unknown mode: {mode}")
        template, n_prefix = self._templates[mode]
        return assemble_prompts(label, self.cls_ctx, template, n_prefix,
                                batch_tile=self.batch_tile)


# Pure-JAX reference for correctness checking.
def _reference_forward(learner, label, mode):
    cls_ctx = learner.cls_ctx[label]
    if mode == 'get_cls_ctx':
        return cls_ctx
    b = label.shape[0]
    if mode == 'rgb':
        prefix, suffix = learner.rgb_token_prefix, learner.rgb_token_suffix
    elif mode == 'ir':
        prefix, suffix = learner.ir_token_prefix, learner.ir_token_suffix
    else:
        prefix, suffix = learner.token_prefix, learner.token_suffix
    prefix = jnp.broadcast_to(prefix, (b,) + prefix.shape[1:])
    suffix = jnp.broadcast_to(suffix, (b,) + suffix.shape[1:])
    return jnp.concatenate([prefix, cls_ctx, suffix], axis=1)


if __name__ == "__main__":
    num_class = 8
    key = jax.random.PRNGKey(0)

    ok = True
    for dtype in (jnp.float32, jnp.bfloat16):
        learner = PromptLearnerShare(num_class, dtype=dtype, key=key)
        # small batch (2) plus a non-tile-multiple batch (5) to exercise the
        # ragged last block / clamped tail-row gathers.
        for label in (jnp.array([3, 5], dtype=jnp.int32),
                      jnp.array([0, 7, 2, 4, 1], dtype=jnp.int32)):
            for mode in ('rgb', 'ir', 'common', 'get_cls_ctx'):
                out = learner.forward(label, mode=mode)
                out = jax.block_until_ready(out)
                ref = _reference_forward(learner, label, mode)
                # pure data movement -> should be bit-exact
                if out.shape != ref.shape or not jnp.array_equal(out, ref):
                    ok = False
                    print(f"MISMATCH dtype={dtype.__name__} mode={mode} "
                          f"b={label.shape[0]}: {out.shape} vs {ref.shape}")

    if ok:
        print("KERNEL_OK")
</pallas_src>

<mosaic_0001>
module attributes {stable_mosaic.version = 11 : i64} {
  func.func @_assemble_kernel(%arg0: i32, %arg1: memref<2xi32, #tpu.memory_space<smem>>, %arg2: memref<1x77x512xf32, #tpu.memory_space<vmem>>, %arg3: memref<8x4x512xf32, #tpu.memory_space<any>>, %arg4: memref<1x77x512xf32, #tpu.memory_space<vmem>>, %arg5: memref<1x4x512xf32, #tpu.memory_space<vmem>>, %arg6: memref<1x!tpu.dma_semaphore, #tpu.memory_space<semaphore_mem>>) attributes {dimension_semantics = [#tpu.dimension_semantics<parallel>], iteration_bounds = array<i64: 2>, scalar_prefetch = 1 : i64, scratch_operands = 2 : i64, tpu.core_type = #tpu.core_type<tc>, window_params = [{pipeline_mode = #tpu.pipeline_mode<synchronous>, transform_indices = @transform_0, window_bounds = array<i64: 1, 77, 512>}, {}, {transform_indices = @transform_2, window_bounds = array<i64: 1, 77, 512>}]} {
    %c1_i32 = arith.constant 1 : i32
    %0 = arith.muli %arg0, %c1_i32 : i32
    %c0_i32 = arith.constant 0 : i32
    %1 = arith.addi %0, %c0_i32 : i32
    %c1_i32_0 = arith.constant 1 : i32
    %2 = arith.minsi %1, %c1_i32_0 : i32
    %3 = arith.index_cast %2 : i32 to index
    %4 = memref.load %arg1[%3] : memref<2xi32, #tpu.memory_space<smem>>
    %c0_i32_1 = arith.constant 0 : i32
    %c0_i32_2 = arith.constant 0 : i32
    %c0_i32_3 = arith.constant 0 : i32
    %c0_i32_4 = arith.constant 0 : i32
    %5 = tpu.memref_slice %arg3[%4, %c0_i32_3, %c0_i32_4] : memref<8x4x512xf32, #tpu.memory_space<any>> -> memref<1x4x512xf32, #tpu.memory_space<any>>
    %6 = tpu.memref_squeeze %5 : memref<1x4x512xf32, #tpu.memory_space<any>> -> memref<4x512xf32, #tpu.memory_space<any>>
    %c0_i32_5 = arith.constant 0 : i32
    %c0_i32_6 = arith.constant 0 : i32
    %7 = tpu.memref_slice %arg5[%c0_i32_1, %c0_i32_5, %c0_i32_6] : memref<1x4x512xf32, #tpu.memory_space<vmem>> -> memref<1x4x512xf32, #tpu.memory_space<vmem>>
    %8 = tpu.memref_squeeze %7 : memref<1x4x512xf32, #tpu.memory_space<vmem>> -> memref<4x512xf32, #tpu.memory_space<vmem>>
    %9 = tpu.memref_slice %arg6[%c0_i32_2] : memref<1x!tpu.dma_semaphore, #tpu.memory_space<semaphore_mem>> -> memref<1x!tpu.dma_semaphore, #tpu.memory_space<semaphore_mem>>
    %10 = tpu.memref_squeeze %9 : memref<1x!tpu.dma_semaphore, #tpu.memory_space<semaphore_mem>> -> memref<!tpu.dma_semaphore, #tpu.memory_space<semaphore_mem>>
    tpu.enqueue_dma source(%6 : memref<4x512xf32, #tpu.memory_space<any>>) target(%8 : memref<4x512xf32, #tpu.memory_space<vmem>>) target_semaphore(%10 : memref<!tpu.dma_semaphore, #tpu.memory_space<semaphore_mem>>)
    %c0 = arith.constant 0 : index
    %c0_7 = arith.constant 0 : index
    %c0_8 = arith.constant 0 : index
    %11 = vector.load %arg2[%c0, %c0_7, %c0_8] : memref<1x77x512xf32, #tpu.memory_space<vmem>>, vector<1x77x512xf32>
    %c0_9 = arith.constant 0 : index
    %c0_10 = arith.constant 0 : index
    %c0_11 = arith.constant 0 : index
    %12 = vector.load %arg4[%c0_9, %c0_10, %c0_11] : memref<1x77x512xf32, #tpu.memory_space<vmem>>, vector<1x77x512xf32>
    tpu.vector_store %arg4[%c0_9, %c0_10, %c0_11], %11 {strides = array<i32>} : memref<1x77x512xf32, #tpu.memory_space<vmem>>, vector<1x77x512xf32>,
    %c0_i32_12 = arith.constant 0 : i32
    %c0_i32_13 = arith.constant 0 : i32
    %c0_i32_14 = arith.constant 0 : i32
    %c0_i32_15 = arith.constant 0 : i32
    %13 = tpu.memref_slice %arg3[%4, %c0_i32_14, %c0_i32_15] : memref<8x4x512xf32, #tpu.memory_space<any>> -> memref<1x4x512xf32, #tpu.memory_space<any>>
    %14 = tpu.memref_squeeze %13 : memref<1x4x512xf32, #tpu.memory_space<any>> -> memref<4x512xf32, #tpu.memory_space<any>>
    %c0_i32_16 = arith.constant 0 : i32
    %c0_i32_17 = arith.constant 0 : i32
    %15 = tpu.memref_slice %arg5[%c0_i32_12, %c0_i32_16, %c0_i32_17] : memref<1x4x512xf32, #tpu.memory_space<vmem>> -> memref<1x4x512xf32, #tpu.memory_space<vmem>>
    %16 = tpu.memref_squeeze %15 : memref<1x4x512xf32, #tpu.memory_space<vmem>> -> memref<4x512xf32, #tpu.memory_space<vmem>>
    %17 = tpu.memref_slice %arg6[%c0_i32_13] : memref<1x!tpu.dma_semaphore, #tpu.memory_space<semaphore_mem>> -> memref<1x!tpu.dma_semaphore, #tpu.memory_space<semaphore_mem>>
    %18 = tpu.memref_squeeze %17 : memref<1x!tpu.dma_semaphore, #tpu.memory_space<semaphore_mem>> -> memref<!tpu.dma_semaphore, #tpu.memory_space<semaphore_mem>>
    tpu.wait_dma2 semaphore(%18 : memref<!tpu.dma_semaphore, #tpu.memory_space<semaphore_mem>>) src(%14 : memref<4x512xf32, #tpu.memory_space<any>>) dst(%16 : memref<4x512xf32, #tpu.memory_space<vmem>>)
    %c0_18 = arith.constant 0 : index
    %c0_19 = arith.constant 0 : index
    %c0_20 = arith.constant 0 : index
    %19 = vector.load %arg5[%c0_18, %c0_19, %c0_20] : memref<1x4x512xf32, #tpu.memory_space<vmem>>, vector<1x4x512xf32>
    %c0_21 = arith.constant 0 : index
    %c6 = arith.constant 6 : index
    %c0_22 = arith.constant 0 : index
    %20 = vector.load %arg4[%c0_21, %c6, %c0_22] : memref<1x77x512xf32, #tpu.memory_space<vmem>>, vector<1x4x512xf32>
    tpu.vector_store %arg4[%c0_21, %c6, %c0_22], %19 {strides = array<i32>} : memref<1x77x512xf32, #tpu.memory_space<vmem>>, vector<1x4x512xf32>,
    return
  }
  func.func @transform_0(%arg0: i32, %arg1: memref<2xi32, #tpu.memory_space<smem>>) -> (i32, i32, i32) {
    %c0_i32 = arith.constant 0 : i32
    %c0_i32_0 = arith.constant 0 : i32
    %c0_i32_1 = arith.constant 0 : i32
    %c0_i32_2 = arith.constant 0 : i32
    return %c0_i32, %c0_i32_0, %c0_i32_1 : i32, i32, i32
  }
  func.func @transform_2(%arg0: i32, %arg1: memref<2xi32, #tpu.memory_space<smem>>) -> (i32, i32, i32) {
    %c0_i32 = arith.constant 0 : i32
    %c0_i32_0 = arith.constant 0 : i32
    %c0_i32_1 = arith.constant 0 : i32
    return %arg0, %c0_i32, %c0_i32_0 : i32, i32, i32
  }
}

</mosaic_0001>

<llo_original>
// kernel: tpu_custom_call.1
$region0: #{tpu_custom_call.1}
  #allocation0 [shape = 'u32[]', space=smem, size = 0x4, offset = 0x4, fixed_abs, tag = 'smem constant byte address 0x4 - core index']
  #allocation1 [shape = 'u32[144,128]{1,0:T(1,128)}', space=vmem, size = 0x12000, scoped, tag = 'internal scratch']
  #allocation2 [shape = 'f32[1,4,512]{2,1,0:T(4,128)}', space=vmem, size = 0x2000, scoped, tag = 'scratch operand']
  #allocation3 [shape = 's32[1]{0}', space=sflag, size = 0x4, scoped, tag = 'scratch operand']
  #allocation4 [shape = 's32[1]{0}', space=sflag, size = 0x4, scoped, tag = 'scoped memory for tpu_custom_call.1']
  #allocation5 [shape = 'u8[512]{0}', space=smem, size = 0x200, scoped, tag = 'prefetched SMEM operand 0']
  #allocation6 [shape = 's32[]', space=sflag, size = 0x4, offset = 0, fixed_abs, tag = 'sflag constant byte address 0x0 - dummy sync flag']
  %s0 = inlined_call_operand.vmem [shape: s32[2], index: 0, kind: input, shape index: {}]
  %s1 = inlined_call_operand.vmem [shape: f32[1,77,512], index: 1, kind: input, shape index: {}]
  %s2 = inlined_call_operand.vmem [shape: f32[8,4,512], index: 2, kind: input, shape index: {}]
  %s3 = inlined_call_operand.vmem [shape: f32[2,77,512], index: 3, kind: output, shape index: {}]
  %s4 = sld [smem:[#allocation0]]
  $region71: #{tpu_custom_call.1} parent=0
    _
  %s6 = ssub.s32 1, %s4
  %s7 = scalar_select 0, %s6, %s4
  %s8 = sshll.u32 %s0, 4
  %s9 = int_to_ptr.vmem [resolvable:$true] %s8
  %11 = dma.vmem_to_smem %s9, 16, [#allocation5], [#allocation4]
  %12 = dma.done [#allocation4], 16
  %13 = sfence
  loop: start=0, step=1, limit=4
  $region2: #{tpu_custom_call.1} parent=0 // loop_pre_header
    _
  $region3: #{tpu_custom_call.1} parent=0 // loop_header
    %s15 = sphi 0, %s19
    %p16 = scmp.ge.s32.totalorder %s15, 4
    %s23 = sphi 0, %s23
    %s25 = sphi 0, %s23
    %s26 = sphi 0, %s25
    %s40 = sphi 0, %s26
    %s46 = sphi 0, %s48
    %s49 = sphi 0, %s46
    %s50 = sphi 0, %s49
    %s66 = sphi 0, %s50
  $region4: #{tpu_custom_call.1} parent=0 // loop_header_branch
    %18 = sbr.rel (%p16) target = $region8
  $region5: #{tpu_custom_call.1} parent=0 // loop_body
    %s20 = ssub.s32 %s15, 1
    %s21 = ssub.s32 %s15, 2
    %s22 = sadd.s32 %s15, 1
    %s24 = sadd.s32 %s23, 1
    %p27 = scmp.eq.s32.totalorder %s15, 1
    %p28 = scmp.ne.s32.totalorder %s23, %s25
    %p29 = scmp.eq.s32.totalorder %s15, 0
    %p30 = por %p28, %p29
    %p31 = scmp.ne.s32.totalorder %s23, %s25
    %p32 = scmp.eq.s32.totalorder %s20, 1
    %p33 = por %p31, %p32
    %p34 = scmp.ne.s32.totalorder %s25, %s26
    %p35 = scmp.eq.s32.totalorder %s20, 0
    %p36 = por %p34, %p35
    %p37 = scmp.ne.s32.totalorder %s25, %s26
    %p38 = scmp.eq.s32.totalorder %s21, 1
    %p39 = por %p37, %p38
    %p41 = scmp.ne.s32.totalorder %s26, %s40
    %p42 = scmp.eq.s32.totalorder %s21, 0
    %p43 = por %p41, %p42
    %s44 = ssub.s32 %s15, %s22
    %p45 = scmp.eq.s32.totalorder %s44, 0
    %s47 = sadd.s32 %s46, 1
    %s48 = scalar_select %p45, %s46, %s47
    %p51 = pneg %p45
    %p52 = scmp.eq.s32.totalorder %s15, 1
    %p53 = por %p51, %p52
    %p54 = scmp.ne.s32.totalorder %s46, %s49
    %p55 = scmp.eq.s32.totalorder %s15, 0
    %p56 = por %p54, %p55
    %p57 = scmp.ne.s32.totalorder %s46, %s49
    %p58 = scmp.eq.s32.totalorder %s20, 1
    %p59 = por %p57, %p58
    %p60 = scmp.ne.s32.totalorder %s49, %s50
    %p61 = scmp.eq.s32.totalorder %s20, 0
    %p62 = por %p60, %p61
    %p63 = scmp.ne.s32.totalorder %s49, %s50
    %p64 = scmp.eq.s32.totalorder %s21, 1
    %p65 = por %p63, %p64
    %p67 = scmp.ne.s32.totalorder %s50, %s66
    %p68 = scmp.eq.s32.totalorder %s21, 0
    %p69 = por %p67, %p68
    %p70 = scmp.le.s32.totalorder 1, %s15
    %p71 = scmp.lt.s32.totalorder %s15, 3
    %p72 = pnand %p70, %p71
    %p73 = pneg %p72
    // Predicated region
    $region9: #{tpu_custom_call.1} parent=5 // pred_check
      _
    $region10: #{tpu_custom_call.1} parent=5 // pred_check_branch
      %75 = sbr.rel (%p72) target = $region12
    $region11: #{tpu_custom_call.1} parent=5 // pred_region
      %s76 = ssub.s32 %s15, 1
      // Predicated region
      $region13: #{tpu_custom_call.1} parent=11 // pred_check
        %p77 = pneg %p36
      $region14: #{tpu_custom_call.1} parent=11 // pred_check_branch
        %79 = sbr.rel (%p77) target = $region16
      $region15: #{tpu_custom_call.1} parent=11 // pred_region
        _
      $region16: #{tpu_custom_call.1} parent=11 // pred_fallthru
        _
    $region12: #{tpu_custom_call.1} parent=5 // pred_fallthru
      _
    %p80 = scmp.lt.s32.totalorder %s15, 2
    // Predicated region
    $region17: #{tpu_custom_call.1} parent=5 // pred_check
      %p81 = pneg %p80
    $region18: #{tpu_custom_call.1} parent=5 // pred_check_branch
      %83 = sbr.rel (%p81) target = $region20
    $region19: #{tpu_custom_call.1} parent=5 // pred_region
      _
    $region20: #{tpu_custom_call.1} parent=5 // pred_fallthru
      _
    %p84 = scmp.le.s32.totalorder 1, %s15
    %p85 = scmp.lt.s32.totalorder %s15, 3
    %p86 = pnand %p84, %p85
    %p87 = pneg %p86
    // Predicated region
    $region21: #{tpu_custom_call.1} parent=5 // pred_check
      _
    $region22: #{tpu_custom_call.1} parent=5 // pred_check_branch
      %89 = sbr.rel (%p86) target = $region24
    $region23: #{tpu_custom_call.1} parent=5 // pred_region
      %s90 = ssub.s32 %s15, 1
      %p91 = pneg %p36
      %p92 = pneg %p33
      %p93 = pneg %p62
      %p94 = pneg %p59
      %p95 = scmp.lt.s32.totalorder %s20, 1
      %s96 = scalar_select %p95, %s20, 1
      %s97 = smul.addr %s96, 40
      %s98 = smul.addr %s97, 8
      %s99 = scalar_lea.vmem %s3, %s98
      %p100 = scmp.lt.s32.totalorder %s20, 1
      %s101 = scalar_select %p100, %s20, 1
      %s102 = smul.addr %s101, 40
      %s103 = smul.addr %s102, 8
      %s104 = scalar_lea.vmem %s3, %s103
      %p105 = scmp.lt.s32.totalorder %s20, 1
      %s106 = scalar_select %p105, %s20, 1
      %s107 = sld [smem:[#allocation5 + %s106]]
      %s108 = smul.u32 %s107, 4
      %s109 = smul.addr %s108, 4
      %s110 = scalar_lea.vmem %s2, %s109
      %p112 = scmp.lt.u32.totalorder 16, 8
      %p113 = pneg %p112
      // Predicated region
      $region25: #{tpu_custom_call.1} parent=23 // pred_check
        _
      $region26: #{tpu_custom_call.1} parent=23 // pred_check_branch
        %115 = sbr.rel (%p112) target = $region28
      $region27: #{tpu_custom_call.1} parent=23 // pred_region
        %s131 = sand.u32 16, 7
        %p132 = scmp.eq.s32.totalorder %s131, 0
        // Predicated region
        $region40: #{tpu_custom_call.1} parent=27 // pred_check
          %p133 = pneg %p132
        $region41: #{tpu_custom_call.1} parent=27 // pred_check_branch
          %135 = sbr.rel (%p133) target = $region43
        $region42: #{tpu_custom_call.1} parent=27 // pred_region
          loop: start=0, step=1, limit=1
          $region44: #{tpu_custom_call.1} parent=42 // loop_pre_header
            _
          $region45: #{tpu_custom_call.1} parent=42 // loop_header
            %s137 = sphi 0, %s141
            %p138 = scmp.ge.s32.totalorder %s137, 1
            %s142 = sphi %s110, %s110
            %s143 = sphi [#allocation2], [#allocation2]
          $region46: #{tpu_custom_call.1} parent=42 // loop_header_branch
            %140 = sbr.rel (%p138) target = $region50
          $region47: #{tpu_custom_call.1} parent=42 // loop_body
            %v144 = vld [vmem:[%s142] sm:$0xff]
            %145 = vst [vmem:[%s143] sm:$0xff] %v144
            %v146 = vld [vmem:[%s142 + $0x8] sm:$0xff]
            %147 = vst [vmem:[%s143 + $0x8] sm:$0xff] %v146
          $region48: #{tpu_custom_call.1} parent=42 // loop_footer
            %s141 = sadd.s32 1, %s137
          $region49: #{tpu_custom_call.1} parent=42 // loop_footer_branch
            %136 = sbr.rel target = $region45
          $region50: #{tpu_custom_call.1} parent=42 // loop_exit
            _
        $region43: #{tpu_custom_call.1} parent=27 // pred_fallthru
          _
        %p148 = pneg %p132
        // Predicated region
        $region51: #{tpu_custom_call.1} parent=27 // pred_check
          _
        $region52: #{tpu_custom_call.1} parent=27 // pred_check_branch
          %150 = sbr.rel (%p132) target = $region54
        $region53: #{tpu_custom_call.1} parent=27 // pred_region
          %s151 = sand.u32 16, 7
        $region54: #{tpu_custom_call.1} parent=27 // pred_fallthru
          _
      $region28: #{tpu_custom_call.1} parent=23 // pred_fallthru
        _
      // Predicated region
      $region29: #{tpu_custom_call.1} parent=23 // pred_check
        %p116 = pneg %p112
      $region30: #{tpu_custom_call.1} parent=23 // pred_check_branch
        %118 = sbr.rel (%p116) target = $region32
      $region31: #{tpu_custom_call.1} parent=23 // pred_region
        %s119 = sshll.u32 1, 16
        %s120 = ssub.s32 %s119, 1
        loop: start=0, step=1, limit=1
        $region33: #{tpu_custom_call.1} parent=31 // loop_pre_header
          _
        $region34: #{tpu_custom_call.1} parent=31 // loop_header
          %s122 = sphi 0, %s126
          %p123 = scmp.ge.s32.totalorder %s122, 1
          %s127 = sphi %s110, %s110
          %s128 = sphi [#allocation2], [#allocation2]
        $region35: #{tpu_custom_call.1} parent=31 // loop_header_branch
          %125 = sbr.rel (%p123) target = $region39
        $region36: #{tpu_custom_call.1} parent=31 // loop_body
          %v129 = vld [vmem:[%s127] sm:%s120]
          %130 = vst [vmem:[%s128] sm:%s120] %v129
        $region37: #{tpu_custom_call.1} parent=31 // loop_footer
          %s126 = sadd.s32 1, %s122
        $region38: #{tpu_custom_call.1} parent=31 // loop_footer_branch
          %121 = sbr.rel target = $region34
        $region39: #{tpu_custom_call.1} parent=31 // loop_exit
          _
      $region32: #{tpu_custom_call.1} parent=23 // pred_fallthru
        _
      // Predicated region
      $region55: #{tpu_custom_call.1} parent=23 // pred_check
        _
      $region56: #{tpu_custom_call.1} parent=23 // pred_check_branch
        %154 = sbr.rel (0) target = $region58
      $region57: #{tpu_custom_call.1} parent=23 // pred_region
        %155 = vsyncadd [#allocation3], 256
      $region58: #{tpu_custom_call.1} parent=23 // pred_fallthru
        _
      %v156 = vld [vmem:[%s1] sm:$0xff]
      %v157 = vld [vmem:[%s1 + $0x8] sm:$0xff]
      %v158 = vld [vmem:[%s1 + $0x10] sm:$0xff]
      %v159 = vld [vmem:[%s1 + $0x18] sm:$0xff]
      %v160 = vld [vmem:[%s1 + $0x20] sm:$0xff]
      %v161 = vld [vmem:[%s1 + $0x28] sm:$0xff]
      %v162 = vld [vmem:[%s1 + $0x30] sm:$0xff]
      %v163 = vld [vmem:[%s1 + $0x38] sm:$0xff]
      %v164 = vld [vmem:[%s1 + $0x40] sm:$0xff]
      %v165 = vld [vmem:[%s1 + $0x48] sm:$0xff]
      %v166 = vld [vmem:[%s1 + $0x50] sm:$0xff]
      %v167 = vld [vmem:[%s1 + $0x58] sm:$0xff]
      %v168 = vld [vmem:[%s1 + $0x60] sm:$0xff]
      %v169 = vld [vmem:[%s1 + $0x68] sm:$0xff]
      %v170 = vld [vmem:[%s1 + $0x70] sm:$0xff]
      %v171 = vld [vmem:[%s1 + $0x78] sm:$0xff]
      %v172 = vld [vmem:[%s1 + $0x80] sm:$0xff]
      %v173 = vld [vmem:[%s1 + $0x88] sm:$0xff]
      %v174 = vld [vmem:[%s1 + $0x90] sm:$0xff]
      %v175 = vld [vmem:[%s1 + $0x98] sm:$0xff]
      %v176 = vld [vmem:[%s1 + $0xa0] sm:$0xff]
      %v177 = vld [vmem:[%s1 + $0xa8] sm:$0xff]
      %v178 = vld [vmem:[%s1 + $0xb0] sm:$0xff]
      %v179 = vld [vmem:[%s1 + $0xb8] sm:$0xff]
      %v180 = vld [vmem:[%s1 + $0xc0] sm:$0xff]
      %v181 = vld [vmem:[%s1 + $0xc8] sm:$0xff]
      %v182 = vld [vmem:[%s1 + $0xd0] sm:$0xff]
      %v183 = vld [vmem:[%s1 + $0xd8] sm:$0xff]
      %v184 = vld [vmem:[%s1 + $0xe0] sm:$0xff]
      %v185 = vld [vmem:[%s1 + $0xe8] sm:$0xff]
      %v186 = vld [vmem:[%s1 + $0xf0] sm:$0xff]
      %v187 = vld [vmem:[%s1 + $0xf8] sm:$0xff]
      %v188 = vld [vmem:[%s1 + $0x100] sm:$0xff]
      %v189 = vld [vmem:[%s1 + $0x108] sm:$0xff]
      %v190 = vld [vmem:[%s1 + $0x110] sm:$0xff]
      %v191 = vld [vmem:[%s1 + $0x118] sm:$0xff]
      %v192 = vld [vmem:[%s1 + $0x120] sm:$0x1f]
      %v193 = vld [vmem:[%s1 + $0x128] sm:$0x1f]
      %v194 = vld [vmem:[%s1 + $0x130] sm:$0x1f]
      %v195 = vld [vmem:[%s1 + $0x138] sm:$0x1f]
      %196 = vst [vmem:[%s104] sm:$0xff] %v156
      %197 = vst [vmem:[%s104 + $0x8] sm:$0xff] %v157
      %198 = vst [vmem:[%s104 + $0x10] sm:$0xff] %v158
      %199 = vst [vmem:[%s104 + $0x18] sm:$0xff] %v159
      %200 = vst [vmem:[%s104 + $0x20] sm:$0xff] %v160
      %201 = vst [vmem:[%s104 + $0x28] sm:$0xff] %v161
      %202 = vst [vmem:[%s104 + $0x30] sm:$0xff] %v162
      %203 = vst [vmem:[%s104 + $0x38] sm:$0xff] %v163
      %204 = vst [vmem:[%s104 + $0x40] sm:$0xff] %v164
      %205 = vst [vmem:[%s104 + $0x48] sm:$0xff] %v165
      %206 = vst [vmem:[%s104 + $0x50] sm:$0xff] %v166
      %207 = vst [vmem:[%s104 + $0x58] sm:$0xff] %v167
      %208 = vst [vmem:[%s104 + $0x60] sm:$0xff] %v168
      %209 = vst [vmem:[%s104 + $0x68] sm:$0xff] %v169
      %210 = vst [vmem:[%s104 + $0x70] sm:$0xff] %v170
      %211 = vst [vmem:[%s104 + $0x78] sm:$0xff] %v171
      %212 = vst [vmem:[%s104 + $0x80] sm:$0xff] %v172
      %213 = vst [vmem:[%s104 + $0x88] sm:$0xff] %v173
      %214 = vst [vmem:[%s104 + $0x90] sm:$0xff] %v174
      %215 = vst [vmem:[%s104 + $0x98] sm:$0xff] %v175
      %216 = vst [vmem:[%s104 + $0xa0] sm:$0xff] %v176
      %217 = vst [vmem:[%s104 + $0xa8] sm:$0xff] %v177
      %218 = vst [vmem:[%s104 + $0xb0] sm:$0xff] %v178
      %219 = vst [vmem:[%s104 + $0xb8] sm:$0xff] %v179
      %220 = vst [vmem:[%s104 + $0xc0] sm:$0xff] %v180
      %221 = vst [vmem:[%s104 + $0xc8] sm:$0xff] %v181
      %222 = vst [vmem:[%s104 + $0xd0] sm:$0xff] %v182
      %223 = vst [vmem:[%s104 + $0xd8] sm:$0xff] %v183
      %224 = vst [vmem:[%s104 + $0xe0] sm:$0xff] %v184
      %225 = vst [vmem:[%s104 + $0xe8] sm:$0xff] %v185
      %226 = vst [vmem:[%s104 + $0xf0] sm:$0xff] %v186
      %227 = vst [vmem:[%s104 + $0xf8] sm:$0xff] %v187
      %228 = vst [vmem:[%s104 + $0x100] sm:$0xff] %v188
      %229 = vst [vmem:[%s104 + $0x108] sm:$0xff] %v189
      %230 = vst [vmem:[%s104 + $0x110] sm:$0xff] %v190
      %231 = vst [vmem:[%s104 + $0x118] sm:$0xff] %v191
      %232 = vst [vmem:[%s104 + $0x120] sm:$0x1f] %v192
      %233 = vst [vmem:[%s104 + $0x128] sm:$0x1f] %v193
      %234 = vst [vmem:[%s104 + $0x130] sm:$0x1f] %v194
      %235 = vst [vmem:[%s104 + $0x138] sm:$0x1f] %v195
      %s236 = smul.u32 4, 1
      %s237 = smul.u32 %s236, 4
      %s238 = sshll.u32 %s237, 4
      %239 = dma.done [#allocation3], %s238
      %v240 = vld [vmem:[#allocation2] sm:$0xff]
      %v241 = vld [vmem:[#allocation2 + $0x8] sm:$0xff]
      %v244 = vcombine.high %v240, %v240
      %v245 = vcombine.high %v241, %v241
      %v246 = vrot.slane %v240, 2
      %v247 = vrot.slane %v244, 2
      %v248 = vrot.slane %v241, 2
      %v249 = vrot.slane %v245, 2
      %254 = vst [vmem:[%s104] sm:$0xc0] %v246
      %255 = vst [vmem:[%s104 + $0x8] sm:$0xc0] %v247
      %256 = vst [vmem:[%s104 + $0x10] sm:$0xc0] %v248
      %257 = vst [vmem:[%s104 + $0x18] sm:$0xc0] %v249
      %258 = vst [vmem:[%s104 + $0x20] sm:$0x3] %v246
      %259 = vst [vmem:[%s104 + $0x28] sm:$0x3] %v247
      %260 = vst [vmem:[%s104 + $0x30] sm:$0x3] %v248
      %261 = vst [vmem:[%s104 + $0x38] sm:$0x3] %v249
      %p262 = scmp.lt.s32.totalorder %s20, 1
      %s263 = scalar_select %p262, %s20, 1
      %s264 = smul.addr %s263, 40
      %s265 = smul.addr %s264, 8
      %s266 = scalar_lea.vmem %s3, %s265
      // Predicated region
      $region59: #{tpu_custom_call.1} parent=23 // pred_check
        %p267 = pneg %p59
      $region60: #{tpu_custom_call.1} parent=23 // pred_check_branch
        %269 = sbr.rel (%p267) target = $region62
      $region61: #{tpu_custom_call.1} parent=23 // pred_region
        _
      $region62: #{tpu_custom_call.1} parent=23 // pred_fallthru
        _
    $region24: #{tpu_custom_call.1} parent=5 // pred_fallthru
      _
    %p270 = scmp.le.s32.totalorder 2, %s15
    // Predicated region
    $region63: #{tpu_custom_call.1} parent=5 // pred_check
      %p271 = pneg %p270
    $region64: #{tpu_custom_call.1} parent=5 // pred_check_branch
      %273 = sbr.rel (%p271) target = $region66
    $region65: #{tpu_custom_call.1} parent=5 // pred_region
      %s274 = ssub.s32 %s15, 2
      // Predicated region
      $region67: #{tpu_custom_call.1} parent=65 // pred_check
        %p275 = pneg %p65
      $region68: #{tpu_custom_call.1} parent=65 // pred_check_branch
        %277 = sbr.rel (%p275) target = $region70
      $region69: #{tpu_custom_call.1} parent=65 // pred_region
        %p278 = scmp.lt.s32.totalorder %s21, 1
        %s279 = scalar_select %p278, %s21, 1
        %s280 = smul.addr %s279, 40
        %s281 = smul.addr %s280, 8
        %s282 = scalar_lea.vmem %s3, %s281
      $region70: #{tpu_custom_call.1} parent=65 // pred_fallthru
        _
    $region66: #{tpu_custom_call.1} parent=5 // pred_fallthru
      _
  $region6: #{tpu_custom_call.1} parent=0 // loop_footer
    %s19 = sadd.s32 1, %s15
  $region7: #{tpu_custom_call.1} parent=0 // loop_footer_branch
    %14 = sbr.rel target = $region3
  $region8: #{tpu_custom_call.1} parent=0 // loop_exit
    _
  %283 = vsyncmov [#allocation3]
  %s284 = vpop.sfrf %283
  %p285 = scmp.eq.s32.totalorder %s284, 0
  %p286 = pneg %p285
  %288 = shalt.err (%p286)

</llo_original>
